<compile_context>
chip_gen: v6e
topology: v6e:2x2x1
jax: 0.10.0
libtpu: 0.0.40
codegen_flags: <defaults>
</compile_context>

<pallas_src>
import functools
import math

import jax
import jax.numpy as jnp
from jax import lax
from jax.experimental import pallas as pl
from jax.experimental.pallas import tpu as pltpu


def _aam_kernel(label_ref, x_ref, w_ref, loss_ref, acc_ref,
                xn_ref, m_ref, l_ref, t_ref,
                *, cos_m, sin_m, th, mm, scale, easy_margin,
                num_classes, class_tile, batch, matmul_dtype):
    c = pl.program_id(0)
    nc = pl.num_programs(0)

    # ---- one-time init (first class tile): normalize x, reset accumulators --
    @pl.when(c == 0)
    def _init():
        x = x_ref[...].astype(jnp.float32)                       # (B, E)
        sumsq = jnp.sum(x * x, axis=-1, keepdims=True)
        # F.normalize eps=1e-12 on the norm  ->  clamp sum-of-squares at 1e-24.
        xn_ref[...] = x * lax.rsqrt(jnp.maximum(sumsq, 1e-24))
        m_ref[...] = jnp.full((batch, 1), -jnp.inf, jnp.float32)  # running max
        l_ref[...] = jnp.zeros((batch, 1), jnp.float32)           # running sumexp
        t_ref[...] = jnp.zeros((batch, 1), jnp.float32)           # target cosine

    # ---- normalize this weight tile (each class tile is visited once) -------
    w = w_ref[...].astype(jnp.float32)                            # (TC, E)
    w_sumsq = jnp.sum(w * w, axis=-1, keepdims=True)
    w_n = w * lax.rsqrt(jnp.maximum(w_sumsq, 1e-24))

    x_n = xn_ref[...]                                             # (B, E)
    if matmul_dtype is not None:                                  # bf16 MXU path
        x_mm = x_n.astype(matmul_dtype)
        w_mm = w_n.astype(matmul_dtype)
    else:                                                         # exact f32 path
        x_mm, w_mm = x_n, w_n

    # cosine = x_n @ w_n^T : contract on the shared E axis directly, no .T
    cosine = lax.dot_general(x_mm, w_mm, (((1,), (1,)), ((), ())),
                             preferred_element_type=jnp.float32)  # (B, TC)

    # ---- target / padding masks (single fused select per element) -----------
    lab = label_ref[...]                                          # (B, 1) int32
    col = c * class_tile + lax.broadcasted_iota(jnp.int32, cosine.shape, 1)
    one_hot = (col == lab)                                        # (B, TC) bool
    drop = one_hot | (col >= num_classes)                         # target + pad

    # Non-target, valid logits for the online log-sum-exp (margin applied only
    # to the target column, and only at finalize).
    masked = jnp.where(drop, -jnp.inf, cosine * scale)            # (B, TC)

    # ---- online log-sum-exp over non-target columns --------------------------
    tile_max = jnp.max(masked, axis=-1, keepdims=True)            # (B, 1)
    m_old = m_ref[...]
    m_new = jnp.maximum(m_old, tile_max)
    m_safe = jnp.where(m_new == -jnp.inf, 0.0, m_new)             # avoid inf-inf
    alpha = jnp.where(m_old == -jnp.inf, 0.0, jnp.exp(m_old - m_safe))
    p = jnp.exp(masked - m_safe)                                  # masked -> 0
    l_ref[...] = l_ref[...] * alpha + jnp.sum(p, axis=-1, keepdims=True)
    m_ref[...] = m_new
    # Accumulate the (unscaled) target cosine; exactly one tile contributes.
    t_ref[...] = t_ref[...] + jnp.sum(jnp.where(one_hot, cosine, 0.0),
                                      axis=-1, keepdims=True)

    # ---- finalize: margin on the target, mean CE loss + top-1 accuracy (%) --
    @pl.when(c == nc - 1)
    def _finalize():
        m = m_ref[...]
        l = l_ref[...]
        lse_rest = jnp.log(l) + m                                 # -inf-safe

        cos_t = t_ref[...]                                        # (B, 1)
        sin_t = jnp.sqrt(jnp.clip(1.0 - cos_t * cos_t, 0.0, 1.0))
        phi_t = cos_t * cos_m - sin_t * sin_m
        if easy_margin:
            phi_t = jnp.where(cos_t > 0, phi_t, cos_t)
        else:
            phi_t = jnp.where(cos_t - th > 0, phi_t, cos_t - mm)
        tgt = phi_t * scale                                       # finite (B, 1)

        # Stable logaddexp(lse_rest, tgt); tgt finite so hi is finite.
        hi = jnp.maximum(lse_rest, tgt)
        lo = jnp.minimum(lse_rest, tgt)
        lse = hi + jnp.log(1.0 + jnp.exp(lo - hi))

        per_example = lse - tgt
        loss_ref[...] = jnp.sum(per_example, axis=0, keepdims=True) * (1.0 / batch)
        # Correct iff the label's (margined, scaled) logit beats every other
        # (scaled) logit.  (Exact float ties differ from torch.topk's
        # lowest-index choice.)
        correct = (tgt >= m).astype(jnp.float32)
        acc_ref[...] = jnp.sum(correct, axis=0, keepdims=True) * (100.0 / batch)


def aamsoftmax_forward(x, weight, label, *, margin=0.2, scale=30.0,
                       easy_margin=False, class_tile=None, matmul_dtype=None):
    """Returns (loss, acc) exactly like the PyTorch module's forward.

    matmul_dtype=jnp.bfloat16 enables the fast MXU path on v6e/v7x (f32 accum);
    default None keeps the cosine matmul in f32 for parity with torch.
    """
    B, E = x.shape
    C, E2 = weight.shape
    assert E == E2 and label.shape[0] == B
    # TODO(synk): labels are assumed in-range [0, C); out-of-range labels give
    # an all-false one-hot row (target cosine 0) with no runtime check.

    # ---- class-tile sizing: 128-aligned (MXU / v5e 4x128^2), VMEM-budgeted ----
    if class_tile is None:
        budget = 24 * 1024 * 1024           # keep 2x weight bufs + temps < ~24 MiB
        tc = 2048                           # conservative for v7x's 64 MiB VMEM
        while tc > 128 and (2 * tc * E * 4 + 8 * B * tc * 4) > budget:
            tc //= 2
        class_tile = tc
    class_tile = max(128, (class_tile // 128) * 128)
    class_tile = min(class_tile, ((C + 127) // 128) * 128)
    C_pad = ((C + class_tile - 1) // class_tile) * class_tile
    num_class_tiles = C_pad // class_tile

    weight_p = weight if C_pad == C else jnp.pad(weight, ((0, C_pad - C), (0, 0)))
    label2d = label.reshape(B, 1).astype(jnp.int32)
    x = x.astype(jnp.float32)

    kernel = functools.partial(
        _aam_kernel,
        cos_m=math.cos(margin),
        sin_m=math.sin(margin),
        th=math.cos(math.pi - margin),
        mm=math.sin(math.pi - margin) * margin,
        scale=float(scale),
        easy_margin=easy_margin,
        num_classes=C,
        class_tile=class_tile,
        batch=B,
        matmul_dtype=matmul_dtype,
    )

    # Advisory cost for XLA scheduling around the custom call.
    cost = pl.CostEstimate(
        flops=2 * B * E * C_pad,
        transcendentals=B * C_pad,
        bytes_accessed=(B * E + C_pad * E + B + 2) * 4,
    )

    # Explicit scoped-VMEM limit (default is 32 MiB; v7x physical is 64 MiB).
    est = (2 * class_tile * E * 4        # double-buffered weight tiles
           + 2 * B * E * 4               # x block + normalized-x scratch
           + 8 * B * class_tile * 4      # (B, TC) f32 elementwise temps (headroom)
           + 16 * B * 4                  # (B, 1) accumulators / column temps
           + (2 << 20))                  # slack
    vmem_limit = int(min(64 * 1024 * 1024, max(32 * 1024 * 1024, est)))

    loss, acc = pl.pallas_call(
        kernel,
        out_shape=(
            jax.ShapeDtypeStruct((1, 1), jnp.float32),
            jax.ShapeDtypeStruct((1, 1), jnp.float32),
        ),
        grid_spec=pltpu.PrefetchScalarGridSpec(
            num_scalar_prefetch=0,
            grid=(num_class_tiles,),
            in_specs=[
                pl.BlockSpec((B, 1), lambda c: (0, 0)),              # label (resident)
                pl.BlockSpec((B, E), lambda c: (0, 0)),              # x (resident)
                pl.BlockSpec((class_tile, E), lambda c: (c, 0)),     # streamed weights
            ],
            out_specs=[
                pl.BlockSpec((1, 1), lambda c: (0, 0)),
                pl.BlockSpec((1, 1), lambda c: (0, 0)),
            ],
            scratch_shapes=[
                pltpu.VMEM((B, E), jnp.float32),   # normalized x
                pltpu.VMEM((B, 1), jnp.float32),   # running row max (non-target)
                pltpu.VMEM((B, 1), jnp.float32),   # running exp-sum (non-target)
                pltpu.VMEM((B, 1), jnp.float32),   # target cosine
            ],
        ),
        compiler_params=pltpu.CompilerParams(
            dimension_semantics=("arbitrary",),    # class axis is a reduction
            vmem_limit_bytes=vmem_limit,
        ),
        cost_estimate=cost,
    )(label2d, x, weight_p)
    return loss[0, 0], acc[0, 0]


if __name__ == "__main__":
    key = jax.random.PRNGKey(0)
    k_x, k_w, k_l = jax.random.split(key, 3)

    # Module config (synthetic, deterministic init).
    embedding_dim = 32
    num_classes = 64
    speed_perturb_flag = False
    if speed_perturb_flag:
        num_classes *= 3
    margin, scale = 0.2, 30.0

    B = 8
    x = jax.random.normal(k_x, (B, embedding_dim), dtype=jnp.float32)
    label = jax.random.randint(k_l, (B,), 0, num_classes, dtype=jnp.int32)

    # xavier_normal_(weight, gain=1): std = sqrt(2 / (fan_in + fan_out))
    std = math.sqrt(2.0 / (num_classes + embedding_dim))
    weight = std * jax.random.normal(
        k_w, (num_classes, embedding_dim), dtype=jnp.float32)

    loss, acc = aamsoftmax_forward(x, weight, label,
                                   margin=margin, scale=scale,
                                   easy_margin=False)
    jax.block_until_ready((loss, acc))
    print("KERNEL_OK")
</pallas_src>

<mosaic_0001>
module attributes {stable_mosaic.version = 11 : i64} {
  func.func @_aam_kernel(%arg0: i32, %arg1: memref<8x1xi32, #tpu.memory_space<vmem>>, %arg2: memref<8x32xf32, #tpu.memory_space<vmem>>, %arg3: memref<128x32xf32, #tpu.memory_space<vmem>>, %arg4: memref<1x1xf32, #tpu.memory_space<vmem>>, %arg5: memref<1x1xf32, #tpu.memory_space<vmem>>, %arg6: memref<8x32xf32, #tpu.memory_space<vmem>>, %arg7: memref<8x1xf32, #tpu.memory_space<vmem>>, %arg8: memref<8x1xf32, #tpu.memory_space<vmem>>, %arg9: memref<8x1xf32, #tpu.memory_space<vmem>>) attributes {dimension_semantics = [#tpu.dimension_semantics<arbitrary>], iteration_bounds = array<i64: 1>, scalar_prefetch = 0 : i64, scratch_operands = 4 : i64, tpu.core_type = #tpu.core_type<tc>, window_params = [{pipeline_mode = #tpu.pipeline_mode<synchronous>, transform_indices = @transform_0, window_bounds = array<i64: 8, 1>}, {pipeline_mode = #tpu.pipeline_mode<synchronous>, transform_indices = @transform_1, window_bounds = array<i64: 8, 32>}, {transform_indices = @transform_2, window_bounds = array<i64: 128, 32>}, {pipeline_mode = #tpu.pipeline_mode<synchronous>, transform_indices = @transform_3, window_bounds = array<i64: 1, 1>}, {pipeline_mode = #tpu.pipeline_mode<synchronous>, transform_indices = @transform_4, window_bounds = array<i64: 1, 1>}]} {
    %c0_i32 = arith.constant 0 : i32
    %0 = arith.cmpi eq, %arg0, %c0_i32 : i32
    %1 = arith.extui %0 : i1 to i32
    %c0_i32_0 = arith.constant 0 : i32
    %2 = arith.cmpi ne, %1, %c0_i32_0 : i32
    scf.if %2 {
      %c0_32 = arith.constant 0 : index
      %c0_33 = arith.constant 0 : index
      %62 = vector.load %arg2[%c0_32, %c0_33] : memref<8x32xf32, #tpu.memory_space<vmem>>, vector<8x32xf32>
      %63 = arith.mulf %62, %62 : vector<8x32xf32>
      %cst_34 = arith.constant dense<0.000000e+00> : vector<8xf32>
      %64 = vector.multi_reduction <add>, %63, %cst_34 [1] : vector<8x32xf32> to vector<8xf32>
      %65 = vector.shape_cast %64 : vector<8xf32> to vector<8x1xf32>
      %cst_35 = arith.constant 1.000000e-24 : f32
      %66 = vector.broadcast %cst_35 : f32 to vector<8x1xf32>
      %67 = arith.maximumf %65, %66 : vector<8x1xf32>
      %68 = math.rsqrt %67 : vector<8x1xf32>
      %69 = vector.broadcast %68 : vector<8x1xf32> to vector<8x32xf32>
      %70 = arith.mulf %62, %69 : vector<8x32xf32>
      %c0_36 = arith.constant 0 : index
      %c0_37 = arith.constant 0 : index
      %71 = vector.load %arg6[%c0_36, %c0_37] : memref<8x32xf32, #tpu.memory_space<vmem>>, vector<8x32xf32>
      tpu.vector_store %arg6[%c0_36, %c0_37], %70 {strides = array<i32>} : memref<8x32xf32, #tpu.memory_space<vmem>>, vector<8x32xf32>,
      %cst_38 = arith.constant 0xFF800000 : f32
      %72 = vector.broadcast %cst_38 : f32 to vector<8x1xf32>
      %c0_39 = arith.constant 0 : index
      %c0_40 = arith.constant 0 : index
      %73 = vector.load %arg7[%c0_39, %c0_40] : memref<8x1xf32, #tpu.memory_space<vmem>>, vector<8x1xf32>
      tpu.vector_store %arg7[%c0_39, %c0_40], %72 {strides = array<i32>} : memref<8x1xf32, #tpu.memory_space<vmem>>, vector<8x1xf32>,
      %cst_41 = arith.constant 0.000000e+00 : f32
      %74 = vector.broadcast %cst_41 : f32 to vector<8x1xf32>
      %c0_42 = arith.constant 0 : index
      %c0_43 = arith.constant 0 : index
      %75 = vector.load %arg8[%c0_42, %c0_43] : memref<8x1xf32, #tpu.memory_space<vmem>>, vector<8x1xf32>
      tpu.vector_store %arg8[%c0_42, %c0_43], %74 {strides = array<i32>} : memref<8x1xf32, #tpu.memory_space<vmem>>, vector<8x1xf32>,
      %cst_44 = arith.constant 0.000000e+00 : f32
      %76 = vector.broadcast %cst_44 : f32 to vector<8x1xf32>
      %c0_45 = arith.constant 0 : index
      %c0_46 = arith.constant 0 : index
      %77 = vector.load %arg9[%c0_45, %c0_46] : memref<8x1xf32, #tpu.memory_space<vmem>>, vector<8x1xf32>
      tpu.vector_store %arg9[%c0_45, %c0_46], %76 {strides = array<i32>} : memref<8x1xf32, #tpu.memory_space<vmem>>, vector<8x1xf32>,
    } else {
    }
    %c0 = arith.constant 0 : index
    %c0_1 = arith.constant 0 : index
    %3 = vector.load %arg3[%c0, %c0_1] : memref<128x32xf32, #tpu.memory_space<vmem>>, vector<128x32xf32>
    %4 = arith.mulf %3, %3 : vector<128x32xf32>
    %cst = arith.constant dense<0.000000e+00> : vector<128xf32>
    %5 = vector.multi_reduction <add>, %4, %cst [1] : vector<128x32xf32> to vector<128xf32>
    %6 = vector.shape_cast %5 : vector<128xf32> to vector<128x1xf32>
    %cst_2 = arith.constant 1.000000e-24 : f32
    %7 = vector.broadcast %cst_2 : f32 to vector<128x1xf32>
    %8 = arith.maximumf %6, %7 : vector<128x1xf32>
    %9 = math.rsqrt %8 : vector<128x1xf32>
    %10 = vector.broadcast %9 : vector<128x1xf32> to vector<128x32xf32>
    %11 = arith.mulf %3, %10 : vector<128x32xf32>
    %c0_3 = arith.constant 0 : index
    %c0_4 = arith.constant 0 : index
    %12 = vector.load %arg6[%c0_3, %c0_4] : memref<8x32xf32, #tpu.memory_space<vmem>>, vector<8x32xf32>
    %cst_5 = arith.constant dense<0.000000e+00> : vector<8x128xf32>
    %13 = tpu.matmul %12, %11, %cst_5 {dimension_numbers = #tpu.dot_dimension_numbers<[1], [1], [0], [0], [0, 0, 1, 0], [], []>} : vector<8x32xf32>, vector<128x32xf32>, vector<8x128xf32> -> vector<8x128xf32>
    %c0_6 = arith.constant 0 : index
    %c0_7 = arith.constant 0 : index
    %14 = vector.load %arg1[%c0_6, %c0_7] : memref<8x1xi32, #tpu.memory_space<vmem>>, vector<8x1xi32>
    %c128_i32 = arith.constant 128 : i32
    %15 = arith.muli %arg0, %c128_i32 : i32
    %16 = tpu.iota {dimensions = array<i32: 1>} : vector<8x128xi32>
    %17 = vector.broadcast %15 : i32 to vector<8x128xi32>
    %18 = arith.addi %17, %16 : vector<8x128xi32>
    %19 = vector.broadcast %14 : vector<8x1xi32> to vector<8x128xi32>
    %20 = arith.cmpi eq, %18, %19 : vector<8x128xi32>
    %c64_i32 = arith.constant 64 : i32
    %21 = vector.broadcast %c64_i32 : i32 to vector<8x128xi32>
    %22 = arith.cmpi sge, %18, %21 : vector<8x128xi32>
    %23 = arith.ori %20, %22 : vector<8x128xi1>
    %cst_8 = arith.constant 3.000000e+01 : f32
    %24 = vector.broadcast %cst_8 : f32 to vector<8x128xf32>
    %25 = arith.mulf %13, %24 : vector<8x128xf32>
    %cst_9 = arith.constant 0xFF800000 : f32
    %26 = vector.broadcast %cst_9 : f32 to vector<8x128xf32>
    %27 = arith.select %23, %26, %25 : vector<8x128xi1>, vector<8x128xf32>
    %cst_10 = arith.constant dense<0xFF800000> : vector<8xf32>
    %28 = vector.multi_reduction <maximumf>, %27, %cst_10 [1] : vector<8x128xf32> to vector<8xf32>
    %29 = vector.shape_cast %28 : vector<8xf32> to vector<8x1xf32>
    %c0_11 = arith.constant 0 : index
    %c0_12 = arith.constant 0 : index
    %30 = vector.load %arg7[%c0_11, %c0_12] : memref<8x1xf32, #tpu.memory_space<vmem>>, vector<8x1xf32>
    %31 = arith.maximumf %30, %29 : vector<8x1xf32>
    %cst_13 = arith.constant 0xFF800000 : f32
    %32 = vector.broadcast %cst_13 : f32 to vector<8x1xf32>
    %33 = arith.cmpf oeq, %31, %32 : vector<8x1xf32>
    %cst_14 = arith.constant 0.000000e+00 : f32
    %34 = vector.broadcast %cst_14 : f32 to vector<8x1xf32>
    %35 = arith.select %33, %34, %31 : vector<8x1xi1>, vector<8x1xf32>
    %cst_15 = arith.constant 0xFF800000 : f32
    %36 = vector.broadcast %cst_15 : f32 to vector<8x1xf32>
    %37 = arith.cmpf oeq, %30, %36 : vector<8x1xf32>
    %38 = arith.subf %30, %35 : vector<8x1xf32>
    %39 = math.exp %38 : vector<8x1xf32>
    %cst_16 = arith.constant 0.000000e+00 : f32
    %40 = vector.broadcast %cst_16 : f32 to vector<8x1xf32>
    %41 = arith.select %37, %40, %39 : vector<8x1xi1>, vector<8x1xf32>
    %42 = vector.broadcast %35 : vector<8x1xf32> to vector<8x128xf32>
    %43 = arith.subf %27, %42 : vector<8x128xf32>
    %44 = math.exp %43 : vector<8x128xf32>
    %c0_17 = arith.constant 0 : index
    %c0_18 = arith.constant 0 : index
    %45 = vector.load %arg8[%c0_17, %c0_18] : memref<8x1xf32, #tpu.memory_space<vmem>>, vector<8x1xf32>
    %46 = arith.mulf %45, %41 : vector<8x1xf32>
    %cst_19 = arith.constant dense<0.000000e+00> : vector<8xf32>
    %47 = vector.multi_reduction <add>, %44, %cst_19 [1] : vector<8x128xf32> to vector<8xf32>
    %48 = vector.shape_cast %47 : vector<8xf32> to vector<8x1xf32>
    %49 = arith.addf %46, %48 : vector<8x1xf32>
    %c0_20 = arith.constant 0 : index
    %c0_21 = arith.constant 0 : index
    %50 = vector.load %arg8[%c0_20, %c0_21] : memref<8x1xf32, #tpu.memory_space<vmem>>, vector<8x1xf32>
    tpu.vector_store %arg8[%c0_20, %c0_21], %49 {strides = array<i32>} : memref<8x1xf32, #tpu.memory_space<vmem>>, vector<8x1xf32>,
    %c0_22 = arith.constant 0 : index
    %c0_23 = arith.constant 0 : index
    %51 = vector.load %arg7[%c0_22, %c0_23] : memref<8x1xf32, #tpu.memory_space<vmem>>, vector<8x1xf32>
    tpu.vector_store %arg7[%c0_22, %c0_23], %31 {strides = array<i32>} : memref<8x1xf32, #tpu.memory_space<vmem>>, vector<8x1xf32>,
    %c0_24 = arith.constant 0 : index
    %c0_25 = arith.constant 0 : index
    %52 = vector.load %arg9[%c0_24, %c0_25] : memref<8x1xf32, #tpu.memory_space<vmem>>, vector<8x1xf32>
    %cst_26 = arith.constant 0.000000e+00 : f32
    %53 = vector.broadcast %cst_26 : f32 to vector<8x128xf32>
    %54 = arith.select %20, %13, %53 : vector<8x128xi1>, vector<8x128xf32>
    %cst_27 = arith.constant dense<0.000000e+00> : vector<8xf32>
    %55 = vector.multi_reduction <add>, %54, %cst_27 [1] : vector<8x128xf32> to vector<8xf32>
    %56 = vector.shape_cast %55 : vector<8xf32> to vector<8x1xf32>
    %57 = arith.addf %52, %56 : vector<8x1xf32>
    %c0_28 = arith.constant 0 : index
    %c0_29 = arith.constant 0 : index
    %58 = vector.load %arg9[%c0_28, %c0_29] : memref<8x1xf32, #tpu.memory_space<vmem>>, vector<8x1xf32>
    tpu.vector_store %arg9[%c0_28, %c0_29], %57 {strides = array<i32>} : memref<8x1xf32, #tpu.memory_space<vmem>>, vector<8x1xf32>,
    %c0_i32_30 = arith.constant 0 : i32
    %59 = arith.cmpi eq, %arg0, %c0_i32_30 : i32
    %60 = arith.extui %59 : i1 to i32
    %c0_i32_31 = arith.constant 0 : i32
    %61 = arith.cmpi ne, %60, %c0_i32_31 : i32
    scf.if %61 {
      %c0_32 = arith.constant 0 : index
      %c0_33 = arith.constant 0 : index
      %62 = vector.load %arg7[%c0_32, %c0_33] : memref<8x1xf32, #tpu.memory_space<vmem>>, vector<8x1xf32>
      %c0_34 = arith.constant 0 : index
      %c0_35 = arith.constant 0 : index
      %63 = vector.load %arg8[%c0_34, %c0_35] : memref<8x1xf32, #tpu.memory_space<vmem>>, vector<8x1xf32>
      %64 = math.log %63 : vector<8x1xf32>
      %65 = arith.addf %64, %62 : vector<8x1xf32>
      %c0_36 = arith.constant 0 : index
      %c0_37 = arith.constant 0 : index
      %66 = vector.load %arg9[%c0_36, %c0_37] : memref<8x1xf32, #tpu.memory_space<vmem>>, vector<8x1xf32>
      %67 = arith.mulf %66, %66 : vector<8x1xf32>
      %cst_38 = arith.constant 1.000000e+00 : f32
      %68 = vector.broadcast %cst_38 : f32 to vector<8x1xf32>
      %69 = arith.subf %68, %67 : vector<8x1xf32>
      %cst_39 = arith.constant 0.000000e+00 : f32
      %cst_40 = arith.constant 1.000000e+00 : f32
      %70 = vector.broadcast %cst_39 : f32 to vector<8x1xf32>
      %71 = arith.maximumf %70, %69 : vector<8x1xf32>
      %72 = vector.broadcast %cst_40 : f32 to vector<8x1xf32>
      %73 = arith.minimumf %72, %71 : vector<8x1xf32>
      %74 = math.sqrt %73 : vector<8x1xf32>
      %cst_41 = arith.constant 0.980066597 : f32
      %75 = vector.broadcast %cst_41 : f32 to vector<8x1xf32>
      %76 = arith.mulf %66, %75 : vector<8x1xf32>
      %cst_42 = arith.constant 0.198669329 : f32
      %77 = vector.broadcast %cst_42 : f32 to vector<8x1xf32>
      %78 = arith.mulf %74, %77 : vector<8x1xf32>
      %79 = arith.subf %76, %78 : vector<8x1xf32>
      %cst_43 = arith.constant -0.980066597 : f32
      %80 = vector.broadcast %cst_43 : f32 to vector<8x1xf32>
      %81 = arith.subf %66, %80 : vector<8x1xf32>
      %cst_44 = arith.constant 0.000000e+00 : f32
      %82 = vector.broadcast %cst_44 : f32 to vector<8x1xf32>
      %83 = arith.cmpf ogt, %81, %82 : vector<8x1xf32>
      %cst_45 = arith.constant 0.0397338644 : f32
      %84 = vector.broadcast %cst_45 : f32 to vector<8x1xf32>
      %85 = arith.subf %66, %84 : vector<8x1xf32>
      %86 = arith.select %83, %79, %85 : vector<8x1xi1>, vector<8x1xf32>
      %cst_46 = arith.constant 3.000000e+01 : f32
      %87 = vector.broadcast %cst_46 : f32 to vector<8x1xf32>
      %88 = arith.mulf %86, %87 : vector<8x1xf32>
      %89 = arith.maximumf %65, %88 : vector<8x1xf32>
      %90 = arith.minimumf %65, %88 : vector<8x1xf32>
      %91 = arith.subf %90, %89 : vector<8x1xf32>
      %92 = math.exp %91 : vector<8x1xf32>
      %cst_47 = arith.constant 1.000000e+00 : f32
      %93 = vector.broadcast %cst_47 : f32 to vector<8x1xf32>
      %94 = arith.addf %93, %92 : vector<8x1xf32>
      %95 = math.log %94 : vector<8x1xf32>
      %96 = arith.addf %89, %95 : vector<8x1xf32>
      %97 = arith.subf %96, %88 : vector<8x1xf32>
      %cst_48 = arith.constant dense<0.000000e+00> : vector<1xf32>
      %98 = vector.multi_reduction <add>, %97, %cst_48 [0] : vector<8x1xf32> to vector<1xf32>
      %99 = vector.shape_cast %98 : vector<1xf32> to vector<1x1xf32>
      %cst_49 = arith.constant 1.250000e-01 : f32
      %100 = vector.broadcast %cst_49 : f32 to vector<1x1xf32>
      %101 = arith.mulf %99, %100 : vector<1x1xf32>
      %c0_50 = arith.constant 0 : index
      %c0_51 = arith.constant 0 : index
      %102 = vector.load %arg4[%c0_50, %c0_51] : memref<1x1xf32, #tpu.memory_space<vmem>>, vector<1x1xf32>
      tpu.vector_store %arg4[%c0_50, %c0_51], %101 {strides = array<i32>} : memref<1x1xf32, #tpu.memory_space<vmem>>, vector<1x1xf32>,
      %103 = arith.cmpf oge, %88, %62 : vector<8x1xf32>
      %104 = arith.extui %103 : vector<8x1xi1> to vector<8x1xi32>
      %105 = arith.sitofp %104 : vector<8x1xi32> to vector<8x1xf32>
      %cst_52 = arith.constant dense<0.000000e+00> : vector<1xf32>
      %106 = vector.multi_reduction <add>, %105, %cst_52 [0] : vector<8x1xf32> to vector<1xf32>
      %107 = vector.shape_cast %106 : vector<1xf32> to vector<1x1xf32>
      %cst_53 = arith.constant 1.250000e+01 : f32
      %108 = vector.broadcast %cst_53 : f32 to vector<1x1xf32>
      %109 = arith.mulf %107, %108 : vector<1x1xf32>
      %c0_54 = arith.constant 0 : index
      %c0_55 = arith.constant 0 : index
      %110 = vector.load %arg5[%c0_54, %c0_55] : memref<1x1xf32, #tpu.memory_space<vmem>>, vector<1x1xf32>
      tpu.vector_store %arg5[%c0_54, %c0_55], %109 {strides = array<i32>} : memref<1x1xf32, #tpu.memory_space<vmem>>, vector<1x1xf32>,
    } else {
    }
    return
  }
  func.func @transform_0(%arg0: i32) -> (i32, i32) {
    %c0_i32 = arith.constant 0 : i32
    %c0_i32_0 = arith.constant 0 : i32
    %c0_i32_1 = arith.constant 0 : i32
    return %c0_i32, %c0_i32_0 : i32, i32
  }
  func.func @transform_1(%arg0: i32) -> (i32, i32) {
    %c0_i32 = arith.constant 0 : i32
    %c0_i32_0 = arith.constant 0 : i32
    %c0_i32_1 = arith.constant 0 : i32
    return %c0_i32, %c0_i32_0 : i32, i32
  }
  func.func @transform_2(%arg0: i32) -> (i32, i32) {
    %c0_i32 = arith.constant 0 : i32
    %c0_i32_0 = arith.constant 0 : i32
    return %arg0, %c0_i32 : i32, i32
  }
  func.func @transform_3(%arg0: i32) -> (i32, i32) {
    %c0_i32 = arith.constant 0 : i32
    %c0_i32_0 = arith.constant 0 : i32
    %c0_i32_1 = arith.constant 0 : i32
    return %c0_i32, %c0_i32_0 : i32, i32
  }
  func.func @transform_4(%arg0: i32) -> (i32, i32) {
    %c0_i32 = arith.constant 0 : i32
    %c0_i32_0 = arith.constant 0 : i32
    %c0_i32_1 = arith.constant 0 : i32
    return %c0_i32, %c0_i32_0 : i32, i32
  }
}

</mosaic_0001>

<llo_original>
// kernel: tpu_custom_call.1
$region0: #{tpu_custom_call.1}
  #allocation0 [shape = 'u32[]', space=smem, size = 0x4, offset = 0x4, fixed_abs, tag = 'smem constant byte address 0x4 - core index']
  #allocation1 [shape = 'u32[144,128]{1,0:T(1,128)}', space=vmem, size = 0x12000, scoped, tag = 'internal scratch']
  #allocation2 [shape = 'f32[8,32]{1,0:T(8,128)}', space=vmem, size = 0x1000, scoped, tag = 'scratch operand']
  #allocation3 [shape = 'f32[8,1]{1,0:T(8,128)}', space=vmem, size = 0x1000, scoped, tag = 'scratch operand']
  #allocation4 [shape = 'f32[8,1]{1,0:T(8,128)}', space=vmem, size = 0x1000, scoped, tag = 'scratch operand']
  #allocation5 [shape = 'f32[8,1]{1,0:T(8,128)}', space=vmem, size = 0x1000, scoped, tag = 'scratch operand']
  %s0 = inlined_call_operand.vmem [shape: s32[8,1], index: 0, kind: input, shape index: {}]
  %s1 = inlined_call_operand.vmem [shape: f32[8,32], index: 1, kind: input, shape index: {}]
  %s2 = inlined_call_operand.vmem [shape: f32[128,32], index: 2, kind: input, shape index: {}]
  %s3 = inlined_call_operand.hbm [shape: f32[1,1], index: 3, kind: output, shape index: {0}]
  %s4 = inlined_call_operand.hbm [shape: f32[1,1], index: 4, kind: output, shape index: {1}]
  %5 = xla_tuple %s3, %s4
  %s6 = sld [smem:[#allocation0]]
  $region38: #{tpu_custom_call.1} parent=0
    _
  %s8 = ssub.s32 1, %s6
  %s9 = scalar_select 0, %s8, %s6
  $region1: #{tpu_custom_call.1} parent=0
    #allocation6 [shape = 'u8[512]{0}', space=vmem, size = 0x400, scoped, tag = 'output window, operand 0, single buffered']
    #allocation7 [shape = 's32[1]{0}', space=sflag, size = 0x4, scoped, tag = 'scoped memory for tpu_custom_call.1']
    #allocation8 [shape = 'u8[512]{0}', space=vmem, size = 0x400, scoped, tag = 'output window, operand 1, single buffered']
    #allocation9 [shape = 's32[1]{0}', space=sflag, size = 0x4, scoped, tag = 'scoped memory for tpu_custom_call.1']
    %10 = vsyncpa [#allocation7], 0
    %11 = vsyncpa [#allocation9], 0
    // Predicated region
    $region2: #{tpu_custom_call.1} parent=1 // pred_check
      _
    $region3: #{tpu_custom_call.1} parent=1 // pred_check_branch
      %13 = sbr.rel (0) target = $region5
    $region4: #{tpu_custom_call.1} parent=1 // pred_region
      _
    $region5: #{tpu_custom_call.1} parent=1 // pred_fallthru
      _
    // Predicated region
    $region6: #{tpu_custom_call.1} parent=1 // pred_check
      _
    $region7: #{tpu_custom_call.1} parent=1 // pred_check_branch
      %15 = sbr.rel (0) target = $region9
    $region8: #{tpu_custom_call.1} parent=1 // pred_region
      _
    $region9: #{tpu_custom_call.1} parent=1 // pred_fallthru
      _
    // Predicated region
    $region10: #{tpu_custom_call.1} parent=1 // pred_check
      _
    $region11: #{tpu_custom_call.1} parent=1 // pred_check_branch
      %17 = sbr.rel (0) target = $region13
    $region12: #{tpu_custom_call.1} parent=1 // pred_region
      _
    $region13: #{tpu_custom_call.1} parent=1 // pred_fallthru
      _
    %p18 = scmp.eq.s32.totalorder 0, 0
    // Predicated region
    $region14: #{tpu_custom_call.1} parent=1 // pred_check
      %p19 = pneg %p18
    $region15: #{tpu_custom_call.1} parent=1 // pred_check_branch
      %21 = sbr.rel (%p19) target = $region17
    $region16: #{tpu_custom_call.1} parent=1 // pred_region
      %v22 = vld [vmem:[%s1] sm:$0xff]
      %v23 = vmul.f32 %v22, %v22
      %vm24 = vcmask 261120
      %v25 = vsel %vm24, %v23, 0.0
      %26 = vadd.xlane.f32.xlu0 %v25
      %v27 = vpop.xlane.xlu0 %26
      %v28 = vmax.f32 %v27, 1e-24
      %v29 = vrsqrt.pop %v28
      %v30 = vmul.f32 %v22, %v29
      %31 = vst.msk [vmem:[#allocation2] sm:$0xff] %vm24, %v30
      %vm32 = vcmask 7168
      %33 = vst.msk [vmem:[#allocation3] sm:$0xff] %vm32, -inf
      %34 = vst.msk [vmem:[#allocation4] sm:$0xff] %vm32, 0.0
      %35 = vst.msk [vmem:[#allocation5] sm:$0xff] %vm32, 0.0
    $region17: #{tpu_custom_call.1} parent=1 // pred_fallthru
      _
    %v36 = vld [vmem:[%s2] sm:$0xff]
    %v37 = vld [vmem:[%s2 + $0x8] sm:$0xff]
    %v38 = vld [vmem:[%s2 + $0x10] sm:$0xff]
    %v39 = vld [vmem:[%s2 + $0x18] sm:$0xff]
    %v40 = vld [vmem:[%s2 + $0x20] sm:$0xff]
    %v41 = vld [vmem:[%s2 + $0x28] sm:$0xff]
    %v42 = vld [vmem:[%s2 + $0x30] sm:$0xff]
    %v43 = vld [vmem:[%s2 + $0x38] sm:$0xff]
    %v44 = vld [vmem:[%s2 + $0x40] sm:$0xff]
    %v45 = vld [vmem:[%s2 + $0x48] sm:$0xff]
    %v46 = vld [vmem:[%s2 + $0x50] sm:$0xff]
    %v47 = vld [vmem:[%s2 + $0x58] sm:$0xff]
    %v48 = vld [vmem:[%s2 + $0x60] sm:$0xff]
    %v49 = vld [vmem:[%s2 + $0x68] sm:$0xff]
    %v50 = vld [vmem:[%s2 + $0x70] sm:$0xff]
    %v51 = vld [vmem:[%s2 + $0x78] sm:$0xff]
    %v52 = vmul.f32 %v36, %v36
    %v53 = vmul.f32 %v37, %v37
    %v54 = vmul.f32 %v38, %v38
    %v55 = vmul.f32 %v39, %v39
    %v56 = vmul.f32 %v40, %v40
    %v57 = vmul.f32 %v41, %v41
    %v58 = vmul.f32 %v42, %v42
    %v59 = vmul.f32 %v43, %v43
    %v60 = vmul.f32 %v44, %v44
    %v61 = vmul.f32 %v45, %v45
    %v62 = vmul.f32 %v46, %v46
    %v63 = vmul.f32 %v47, %v47
    %v64 = vmul.f32 %v48, %v48
    %v65 = vmul.f32 %v49, %v49
    %v66 = vmul.f32 %v50, %v50
    %v67 = vmul.f32 %v51, %v51
    %vm68 = vcmask 261120
    %v69 = vsel %vm68, %v52, 0.0
    %70 = vadd.xlane.f32.xlu0 %v69
    %v71 = vpop.xlane.xlu0 %70
    %v72 = vsel %vm68, %v53, 0.0
    %73 = vadd.xlane.f32.xlu0 %v72
    %v74 = vpop.xlane.xlu0 %73
    %v75 = vsel %vm68, %v54, 0.0
    %76 = vadd.xlane.f32.xlu0 %v75
    %v77 = vpop.xlane.xlu0 %76
    %v78 = vsel %vm68, %v55, 0.0
    %79 = vadd.xlane.f32.xlu0 %v78
    %v80 = vpop.xlane.xlu0 %79
    %v81 = vsel %vm68, %v56, 0.0
    %82 = vadd.xlane.f32.xlu0 %v81
    %v83 = vpop.xlane.xlu0 %82
    %v84 = vsel %vm68, %v57, 0.0
    %85 = vadd.xlane.f32.xlu0 %v84
    %v86 = vpop.xlane.xlu0 %85
    %v87 = vsel %vm68, %v58, 0.0
    %88 = vadd.xlane.f32.xlu0 %v87
    %v89 = vpop.xlane.xlu0 %88
    %v90 = vsel %vm68, %v59, 0.0
    %91 = vadd.xlane.f32.xlu0 %v90
    %v92 = vpop.xlane.xlu0 %91
    %v93 = vsel %vm68, %v60, 0.0
    %94 = vadd.xlane.f32.xlu0 %v93
    %v95 = vpop.xlane.xlu0 %94
    %v96 = vsel %vm68, %v61, 0.0
    %97 = vadd.xlane.f32.xlu0 %v96
    %v98 = vpop.xlane.xlu0 %97
    %v99 = vsel %vm68, %v62, 0.0
    %100 = vadd.xlane.f32.xlu0 %v99
    %v101 = vpop.xlane.xlu0 %100
    %v102 = vsel %vm68, %v63, 0.0
    %103 = vadd.xlane.f32.xlu0 %v102
    %v104 = vpop.xlane.xlu0 %103
    %v105 = vsel %vm68, %v64, 0.0
    %106 = vadd.xlane.f32.xlu0 %v105
    %v107 = vpop.xlane.xlu0 %106
    %v108 = vsel %vm68, %v65, 0.0
    %109 = vadd.xlane.f32.xlu0 %v108
    %v110 = vpop.xlane.xlu0 %109
    %v111 = vsel %vm68, %v66, 0.0
    %112 = vadd.xlane.f32.xlu0 %v111
    %v113 = vpop.xlane.xlu0 %112
    %v114 = vsel %vm68, %v67, 0.0
    %115 = vadd.xlane.f32.xlu0 %v114
    %v116 = vpop.xlane.xlu0 %115
    %v117 = vmax.f32 %v71, 1e-24
    %v118 = vmax.f32 %v74, 1e-24
    %v119 = vmax.f32 %v77, 1e-24
    %v120 = vmax.f32 %v80, 1e-24
    %v121 = vmax.f32 %v83, 1e-24
    %v122 = vmax.f32 %v86, 1e-24
    %v123 = vmax.f32 %v89, 1e-24
    %v124 = vmax.f32 %v92, 1e-24
    %v125 = vmax.f32 %v95, 1e-24
    %v126 = vmax.f32 %v98, 1e-24
    %v127 = vmax.f32 %v101, 1e-24
    %v128 = vmax.f32 %v104, 1e-24
    %v129 = vmax.f32 %v107, 1e-24
    %v130 = vmax.f32 %v110, 1e-24
    %v131 = vmax.f32 %v113, 1e-24
    %v132 = vmax.f32 %v116, 1e-24
    %v133 = vrsqrt.pop %v117
    %v134 = vrsqrt.pop %v118
    %v135 = vrsqrt.pop %v119
    %v136 = vrsqrt.pop %v120
    %v137 = vrsqrt.pop %v121
    %v138 = vrsqrt.pop %v122
    %v139 = vrsqrt.pop %v123
    %v140 = vrsqrt.pop %v124
    %v141 = vrsqrt.pop %v125
    %v142 = vrsqrt.pop %v126
    %v143 = vrsqrt.pop %v127
    %v144 = vrsqrt.pop %v128
    %v145 = vrsqrt.pop %v129
    %v146 = vrsqrt.pop %v130
    %v147 = vrsqrt.pop %v131
    %v148 = vrsqrt.pop %v132
    %v149 = vmul.f32 %v36, %v133
    %v150 = vmul.f32 %v37, %v134
    %v151 = vmul.f32 %v38, %v135
    %v152 = vmul.f32 %v39, %v136
    %v153 = vmul.f32 %v40, %v137
    %v154 = vmul.f32 %v41, %v138
    %v155 = vmul.f32 %v42, %v139
    %v156 = vmul.f32 %v43, %v140
    %v157 = vmul.f32 %v44, %v141
    %v158 = vmul.f32 %v45, %v142
    %v159 = vmul.f32 %v46, %v143
    %v160 = vmul.f32 %v47, %v144
    %v161 = vmul.f32 %v48, %v145
    %v162 = vmul.f32 %v49, %v146
    %v163 = vmul.f32 %v50, %v147
    %v164 = vmul.f32 %v51, %v148
    %v165 = vld [vmem:[#allocation2] sm:$0xff]
    %v167 = vsel %vm68, %v165, 0
    %v170 = vsel %vm68, %v149, 0
    %v173 = vsel %vm68, %v150, 0
    %v176 = vsel %vm68, %v151, 0
    %v179 = vsel %vm68, %v152, 0
    %v182 = vsel %vm68, %v153, 0
    %v185 = vsel %vm68, %v154, 0
    %v188 = vsel %vm68, %v155, 0
    %v191 = vsel %vm68, %v156, 0
    %v194 = vsel %vm68, %v157, 0
    %v197 = vsel %vm68, %v158, 0
    %v200 = vsel %vm68, %v159, 0
    %v203 = vsel %vm68, %v160, 0
    %v206 = vsel %vm68, %v161, 0
    %v209 = vsel %vm68, %v162, 0
    %v212 = vsel %vm68, %v163, 0
    %v215 = vsel %vm68, %v164, 0
    %217 = vmatprep.subr.mxu0 0.0
    %218 = vmatpush1.xpose.msra.mxu0 %v215
    %219 = vmatprep.subr.mxu0 0.0
    %220 = vmatpush1.xpose.msra.mxu0 %v212
    %221 = vmatprep.subr.mxu0 0.0
    %222 = vmatpush1.xpose.msra.mxu0 %v209
    %223 = vmatprep.subr.mxu0 0.0
    %224 = vmatpush1.xpose.msra.mxu0 %v206
    %225 = vmatprep.subr.mxu0 0.0
    %226 = vmatpush1.xpose.msra.mxu0 %v203
    %227 = vmatprep.subr.mxu0 0.0
    %228 = vmatpush1.xpose.msra.mxu0 %v200
    %229 = vmatprep.subr.mxu0 0.0
    %230 = vmatpush1.xpose.msra.mxu0 %v197
    %231 = vmatprep.subr.mxu0 0.0
    %232 = vmatpush1.xpose.msra.mxu0 %v194
    %233 = vmatprep.subr.mxu0 0.0
    %234 = vmatpush1.xpose.msra.mxu0 %v191
    %235 = vmatprep.subr.mxu0 0.0
    %236 = vmatpush1.xpose.msra.mxu0 %v188
    %237 = vmatprep.subr.mxu0 0.0
    %238 = vmatpush1.xpose.msra.mxu0 %v185
    %239 = vmatprep.subr.mxu0 0.0
    %240 = vmatpush1.xpose.msra.mxu0 %v182
    %241 = vmatprep.subr.mxu0 0.0
    %242 = vmatpush1.xpose.msra.mxu0 %v179
    %243 = vmatprep.subr.mxu0 0.0
    %244 = vmatpush1.xpose.msra.mxu0 %v176
    %245 = vmatprep.subr.mxu0 0.0
    %246 = vmatpush1.xpose.msra.mxu0 %v173
    %247 = vmatprep.subr.mxu0 0.0
    %248 = vmatpush1.xpose.msra.mxu0 %v170
    %249 = vmatprep.subr.mxu0 0.0
    %250 = vmatpush2.xpose.msra.mxu0 0.0
    %251 = vmatprep.subr.mxu0 0.0
    %252 = vmatpush2.xpose.msra.mxu0 0.0
    %253 = vmatprep.subr.mxu0 0.0
    %254 = vmatpush2.xpose.msra.mxu0 0.0
    %255 = vmatprep.subr.mxu0 0.0
    %256 = vmatpush2.xpose.msra.mxu0 0.0
    %257 = vmatprep.subr.mxu0 0.0
    %258 = vmatpush2.xpose.msra.mxu0 0.0
    %259 = vmatprep.subr.mxu0 0.0
    %260 = vmatpush2.xpose.msra.mxu0 0.0
    %261 = vmatprep.subr.mxu0 0.0
    %262 = vmatpush2.xpose.msra.mxu0 0.0
    %263 = vmatprep.subr.mxu0 0.0
    %264 = vmatpush2.xpose.msra.mxu0 0.0
    %265 = vmatprep.subr.mxu0 0.0
    %266 = vmatpush2.xpose.msra.mxu0 0.0
    %267 = vmatprep.subr.mxu0 0.0
    %268 = vmatpush2.xpose.msra.mxu0 0.0
    %269 = vmatprep.subr.mxu0 0.0
    %270 = vmatpush2.xpose.msra.mxu0 0.0
    %271 = vmatprep.subr.mxu0 0.0
    %272 = vmatpush2.xpose.msra.mxu0 0.0
    %273 = vmatprep.subr.mxu0 0.0
    %274 = vmatpush2.xpose.msra.mxu0 0.0
    %275 = vmatprep.subr.mxu0 0.0
    %276 = vmatpush2.xpose.msra.mxu0 0.0
    %277 = vmatprep.subr.mxu0 0.0
    %278 = vmatpush2.xpose.msra.mxu0 0.0
    %279 = vmatprep.subr.mxu0 0.0
    %280 = vmatpush2.xpose.msra.mxu0 0.0
    %281 = vmatprep.mubr.f32.mxu0 0.0
    %282 = vmatmul.mubr.f32.gmra.mxu0 %v167
    %v283 = vpop.f32.mrf.mxu0
    %v284 = vadd.f32 0.0, %v283
    %v285 = vpop.f32.mrf.mxu0
    %286 = vdwg.mxu0
    %v287 = vld [vmem:[%s0] sm:$0xff]
    %s288 = smul.u32 0, 128
    %v289 = vlaneseq
    %v290 = vand.u32 %v289, 127
    %v291 = vstv %s288
    %v292 = vadd.s32 %v291, %v290
    %293 = vset.pattern.permute.xlu0 0
    %294 = vperm.xlu0 %293, %v287
    %v295 = vpop.permute.xlu0 %294
    %vm296 = vcmp.eq.s32.totalorder %v292, %v295
    %vm297 = vcmp.ge.s32.totalorder %v292, 64
    %vm298 = vmor %vm296, %vm297
    %v299 = vmul.f32 %v284, 30.0
    %v300 = vsel %vm298, -inf, %v299
    %301 = vmax.xlane.f32.xlu0 %v300
    %v302 = vpop.xlane.xlu0 %301
    %v303 = vld [vmem:[#allocation3] sm:$0xff]
    %v304 = vmax.f32 %v303, %v302
    %vm305 = vcmp.eq.f32.partialorder %v304, -inf
    %v306 = vsel %vm305, 0.0, %v304
    %vm307 = vcmp.eq.f32.partialorder %v303, -inf
    %v308 = vsub.f32 %v303, %v306
    %v309 = vmul.f32 %v308, 1.442695
    %v310 = vpow.pop %v309
    %v311 = vsel %vm307, 0.0, %v310
    %313 = vset.pattern.permute.xlu0 0
    %314 = vperm.xlu0 %313, %v306
    %v315 = vpop.permute.xlu0 %314
    %v317 = vsub.f32 %v300, %v315
    %v318 = vmul.f32 %v317, 1.442695
    %v319 = vpow.pop %v318
    %v320 = vld [vmem:[#allocation4] sm:$0xff]
    %v321 = vmul.f32 %v320, %v311
    %322 = vadd.xlane.f32.xlu0 %v319
    %v323 = vpop.xlane.xlu0 %322
    %v324 = vadd.f32 %v321, %v323
    %vm325 = vcmask 7168
    %326 = vst.msk [vmem:[#allocation4] sm:$0xff] %vm325, %v324
    %327 = vst.msk [vmem:[#allocation3] sm:$0xff] %vm325, %v304
    %v328 = vld [vmem:[#allocation5] sm:$0xff]
    %v329 = vsel %vm296, %v284, 0.0
    %330 = vadd.xlane.f32.xlu0 %v329
    %v331 = vpop.xlane.xlu0 %330
    %v332 = vadd.f32 %v328, %v331
    %333 = vst.msk [vmem:[#allocation5] sm:$0xff] %vm325, %v332
    // Predicated region
    $region18: #{tpu_custom_call.1} parent=1 // pred_check
      %p334 = pneg %p18
    $region19: #{tpu_custom_call.1} parent=1 // pred_check_branch
      %336 = sbr.rel (%p334) target = $region21
    $region20: #{tpu_custom_call.1} parent=1 // pred_region
      %v337 = vld [vmem:[#allocation3] sm:$0xff]
      %v338 = vld [vmem:[#allocation4] sm:$0xff]
      %v339 = vlog2.pop %v338
      %v340 = vmul.f32 %v339, 0.6931472
      %v341 = vadd.f32 %v340, %v337
      %v342 = vld [vmem:[#allocation5] sm:$0xff]
      %v343 = vmul.f32 %v342, %v342
      %v344 = vsub.f32 1.0, %v343
      %v345 = vmax.f32 %v344, 0.0
      %v346 = vmin.f32 %v345, 1.0
      %v347 = vrsqrt.pop %v346
      %v348 = vmul.f32 %v346, %v347
      %vm349 = vcmp.eq.f32.partialorder %v346, inf
      %v350 = vsel %vm349, %v346, %v348
      %vm351 = vcmp.eq.f32.partialorder %v346, 0.0
      %v352 = vand.u32 %v346, 2147483648
      %v353 = vsel %vm351, %v352, %v350
      %v354 = vmul.f32 %v342, 0.9800666
      %v355 = vmul.f32 %v353, 0.19866933
      %v356 = vsub.f32 %v354, %v355
      %v357 = vsub.f32 %v342, -0.9800666
      %vm358 = vcmp.gt.f32.partialorder %v357, 0.0
      %v359 = vsub.f32 %v342, 0.039733864
      %v360 = vsel %vm358, %v356, %v359
      %v361 = vmul.f32 %v360, 30.0
      %v362 = vmax.f32 %v341, %v361
      %v363 = vmin.f32 %v341, %v361
      %v364 = vsub.f32 %v363, %v362
      %v365 = vmul.f32 %v364, 1.442695
      %v366 = vpow.pop %v365
      %v367 = vadd.f32 %v366, 1.0
      %v368 = vlog2.pop %v367
      %v369 = vmul.f32 %v368, 0.6931472
      %v370 = vadd.f32 %v362, %v369
      %v371 = vsub.f32 %v370, %v361
      %v372 = vsel %vm325, %v371, 0.0
      %v373 = vrot.slane %v372, 4
      %v374 = vadd.f32 %v372, %v373
      %v375 = vrot.slane %v374, 2
      %v376 = vadd.f32 %v374, %v375
      %v377 = vrot.slane %v376, 1
      %v378 = vadd.f32 %v376, %v377
      %v379 = vmul.f32 %v378, 0.125
      %vm380 = vcmask 0
      %381 = vst.msk [vmem:[#allocation6] sm:$0x1] %vm380, %v379
      %vm382 = vcmp.ge.f32.partialorder %v361, %v337
      %v383 = vsel %vm382, 1, 0
      %v384 = vcvt.s32.f32 %v383
      %v385 = vsel %vm325, %v384, 0.0
      %v386 = vrot.slane %v385, 4
      %v387 = vadd.f32 %v385, %v386
      %v388 = vrot.slane %v387, 2
      %v389 = vadd.f32 %v387, %v388
      %v390 = vrot.slane %v389, 1
      %v391 = vadd.f32 %v389, %v390
      %v392 = vmul.f32 %v391, 12.5
      %393 = vst.msk [vmem:[#allocation8] sm:$0x1] %vm380, %v392
    $region21: #{tpu_custom_call.1} parent=1 // pred_fallthru
      _
    // Predicated region
    $region22: #{tpu_custom_call.1} parent=1 // pred_check
      _
    $region23: #{tpu_custom_call.1} parent=1 // pred_check_branch
      %395 = sbr.rel (0) target = $region25
    $region24: #{tpu_custom_call.1} parent=1 // pred_region
      %s397 = ssub.s32 16, 16
      %398 = vsyncadd [#allocation7], %s397
      %s400 = sshll.u32 [#allocation6], 4
      %s401 = int_to_ptr.vmem [resolvable:$true] %s400
      %403 = dma.vmem_to_hbm [thread:$0]  %s401, 16, %s3, [#allocation7]
    $region25: #{tpu_custom_call.1} parent=1 // pred_fallthru
      _
    // Predicated region
    $region26: #{tpu_custom_call.1} parent=1 // pred_check
      _
    $region27: #{tpu_custom_call.1} parent=1 // pred_check_branch
      %405 = sbr.rel (0) target = $region29
    $region28: #{tpu_custom_call.1} parent=1 // pred_region
      %s407 = ssub.s32 16, 16
      %408 = vsyncadd [#allocation9], %s407
      %s410 = sshll.u32 [#allocation8], 4
      %s411 = int_to_ptr.vmem [resolvable:$true] %s410
      %413 = dma.vmem_to_hbm [thread:$0]  %s411, 16, %s4, [#allocation9]
    $region29: #{tpu_custom_call.1} parent=1 // pred_fallthru
      _
    // Predicated region
    $region30: #{tpu_custom_call.1} parent=1 // pred_check
      _
    $region31: #{tpu_custom_call.1} parent=1 // pred_check_branch
      %415 = sbr.rel (0) target = $region33
    $region32: #{tpu_custom_call.1} parent=1 // pred_region
      %416 = dma.done [#allocation7], 16
    $region33: #{tpu_custom_call.1} parent=1 // pred_fallthru
      _
    // Predicated region
    $region34: #{tpu_custom_call.1} parent=1 // pred_check
      _
    $region35: #{tpu_custom_call.1} parent=1 // pred_check_branch
      %418 = sbr.rel (0) target = $region37
    $region36: #{tpu_custom_call.1} parent=1 // pred_region
      %419 = dma.done [#allocation9], 16
    $region37: #{tpu_custom_call.1} parent=1 // pred_fallthru
      _
    %420 = vsyncpa [#allocation7], 1
    %421 = vsyncpa [#allocation9], 1

</llo_original>
